<compile_context>
chip_gen: v7x
topology: tpu7x:2x2x1
jax: 0.10.0
libtpu: 0.0.40
codegen_flags: <defaults>
</compile_context>

<pallas_src>
import math
import functools

import jax
import jax.numpy as jnp
from jax import lax
from jax.experimental import pallas as pl
from jax.experimental.pallas import tpu as pltpu


def _self_attention_kernel(x_ref, wqkv_ref, wo_ref, out_ref, attn_ref, *,
                           d_head, num_heads):
    """One block of `bb` batch elements per grid step.

    x_ref    : (bb, S, E)        bf16 input slab
    wqkv_ref : (E, 3P)           bf16 fused [wq*scale | wk | wv] (VMEM resident)
    wo_ref   : (P, P)            bf16 output projection (VMEM resident)
    out_ref  : (bb, S, P)        final output
    attn_ref : (bb, H, S, S)     f32 attention weights
    """
    bb, S, E = x_ref.shape
    P = num_heads * d_head

    # Fused q/k/v projection over all bb*S rows at once (scale folded into wq).
    x2d = x_ref[...].reshape(bb * S, E)                             # (bb*S, E)
    qkv = jnp.dot(x2d, wqkv_ref[...],
                  preferred_element_type=jnp.float32)               # (bb*S, 3P) f32
    # Single f32 -> bf16 cast pass; all per-head operands are slices of this.
    qkv_bf = qkv.astype(jnp.bfloat16)

    for b in range(bb):                                             # static, small
        r0 = b * S
        out_b = None                                                # f32 (S, P) accum
        for h in range(num_heads):                                  # static, small
            lo = h * d_head
            q_h = qkv_bf[r0:r0 + S, lo:lo + d_head]                 # (S, d_head)
            k_h = qkv_bf[r0:r0 + S, P + lo:P + lo + d_head]         # (S, d_head)
            v_h = qkv_bf[r0:r0 + S, 2 * P + lo:2 * P + lo + d_head] # (S, d_head)

            # q @ k^T contracting last dims (no explicit transpose copy at S=8;
            # any implied relayout is a single vreg).
            logits = lax.dot_general(
                q_h, k_h, (((1,), (1,)), ((), ())),
                preferred_element_type=jnp.float32)                 # (S, S) f32

            # softmax over last axis, f32 math, exact normalization
            # (attn weights are returned to the caller).
            m = jnp.max(logits, axis=-1, keepdims=True)
            e = jnp.exp(logits - m)
            w = e / jnp.sum(e, axis=-1, keepdims=True)

            attn_ref[b, h] = w.astype(attn_ref.dtype)

            ao = jnp.dot(w.astype(jnp.bfloat16), v_h,
                         preferred_element_type=jnp.float32)        # (S, d_head)

            # Per-head out-proj accumulation: ao @ wo[h*d : (h+1)*d, :].
            # Row-slicing wo is a cheap sublane slice; avoids lane-axis concat.
            contrib = jnp.dot(ao.astype(jnp.bfloat16),
                              wo_ref[lo:lo + d_head, :],
                              preferred_element_type=jnp.float32)   # (S, P)
            out_b = contrib if out_b is None else out_b + contrib

        out_ref[b] = out_b.astype(out_ref.dtype)


def self_attention_pallas(x, wq, wk, wv, wo, *, d_head, num_heads,
                          batch_block=None, compute_dtype=jnp.bfloat16):
    """x: (B, S, E) float32.
    wq/wk/wv: (E, num_heads*d_head), wo: (P, P) (transposed so y = x @ W).
    batch_block: batch elements per grid step. Default: 2 grid blocks when B is
    even (keeps both v7x TensorCores busy); pass batch_block=B to collapse to a
    single step on single-TC chips (v5e/v6e).
    Returns (out (B, S, P) in x.dtype, attn_weights (B, H, S, S) f32)."""
    B, S, E = x.shape
    P = num_heads * d_head

    if batch_block is None:
        batch_block = B // 2 if (B >= 2 and B % 2 == 0) else B
    assert B % batch_block == 0, "batch_block must divide B"
    num_blocks = B // batch_block

    # Fold the 1/sqrt(d_head) scale into wq (f32) and fuse q/k/v into one slab.
    scale = 1.0 / math.sqrt(d_head)
    wqkv = jnp.concatenate([wq * scale, wk, wv], axis=1)            # (E, 3P)

    x_c = x.astype(compute_dtype)
    wqkv_c = wqkv.astype(compute_dtype)
    wo_c = wo.astype(compute_dtype)

    kernel = functools.partial(_self_attention_kernel,
                               d_head=d_head, num_heads=num_heads)

    out, attn = pl.pallas_call(
        kernel,
        out_shape=(
            jax.ShapeDtypeStruct((B, S, P), x.dtype),
            # The module returns attn_weights, so this O(S^2) write stays f32
            # at these toy shapes (demote/drop it for the large-S rewrite).
            jax.ShapeDtypeStruct((B, num_heads, S, S), jnp.float32),
        ),
        grid_spec=pltpu.PrefetchScalarGridSpec(
            num_scalar_prefetch=0,
            grid=(num_blocks,),
            in_specs=[
                pl.BlockSpec((batch_block, S, E), lambda g: (g, 0, 0)),
                # constant block index -> weights stay resident in VMEM
                pl.BlockSpec((E, 3 * P), lambda g: (0, 0)),
                pl.BlockSpec((P, P), lambda g: (0, 0)),
            ],
            out_specs=[
                pl.BlockSpec((batch_block, S, P), lambda g: (g, 0, 0)),
                pl.BlockSpec((batch_block, num_heads, S, S),
                             lambda g: (g, 0, 0, 0)),
            ],
        ),
        compiler_params=pltpu.CompilerParams(
            dimension_semantics=("parallel",),
            vmem_limit_bytes=32 * 1024 * 1024),
    )(x_c, wqkv_c, wo_c)
    return out, attn


def self_attention_ref(x, wq, wk, wv, wo, *, d_head, num_heads,
                       compute_dtype=jnp.float32):
    """Pure-JAX mirror of the PyTorch forward (attention_mask=None).

    compute_dtype=float32 -> exact module math; compute_dtype=bfloat16 ->
    mirrors the kernel's mixed-precision casts (bf16 operands, f32 accumulate).
    Folding 1/sqrt(d_head) into wq is mathematically identical to torch's
    `attn_logits / sqrt(d_head)`.
    """
    B, S, E = x.shape
    P = num_heads * d_head
    f32 = jnp.float32
    c = lambda t: t.astype(compute_dtype)

    wq_s = wq * (1.0 / math.sqrt(d_head))
    q = jnp.dot(c(x), c(wq_s), preferred_element_type=f32)
    k = jnp.dot(c(x), c(wk), preferred_element_type=f32)
    v = jnp.dot(c(x), c(wv), preferred_element_type=f32)
    q, k, v = [t.reshape(B, S, num_heads, d_head).transpose(0, 2, 1, 3)
               for t in (q, k, v)]
    logits = jnp.einsum("bhqd,bhkd->bhqk", c(q), c(k),
                        preferred_element_type=f32)
    w = jax.nn.softmax(logits, axis=-1)
    attn_out = jnp.einsum("bhqk,bhkd->bhqd", c(w), c(v),
                          preferred_element_type=f32)
    attn_out = attn_out.transpose(0, 2, 1, 3).reshape(B, S, P)
    out = jnp.dot(c(attn_out), c(wo), preferred_element_type=f32)
    return out, w


def xavier_normal(key, fan_out, fan_in):
    # matches nn.init.xavier_normal_ on a (fan_out, fan_in) nn.Linear weight
    std = math.sqrt(2.0 / (fan_in + fan_out))
    return std * jax.random.normal(key, (fan_out, fan_in), dtype=jnp.float32)


if __name__ == "__main__":
    B, S, d_embed = 2, 8, 32
    key = jax.random.PRNGKey(0)

    # Test the module default (num_heads=1) and a multi-head config, with both
    # grid layouts: 2 blocks of 1 batch (v7x dual-TC) and 1 block of 2 batches
    # (fused single-step, preferred on v5e/v6e).
    for d_head, num_heads in [(64, 1), (64, 2)]:
        proj_dim = d_head * num_heads
        kx, kq, kk, kv, ko, key = jax.random.split(key, 6)

        x = jax.random.normal(kx, (B, S, d_embed), dtype=jnp.float32)
        # PyTorch nn.Linear weights are (out, in); transpose so kernel does x @ W.
        wq = xavier_normal(kq, proj_dim, d_embed).T     # (E, P)
        wk = xavier_normal(kk, proj_dim, d_embed).T     # (E, P)
        wv = xavier_normal(kv, proj_dim, d_embed).T     # (E, P)
        wo = xavier_normal(ko, proj_dim, proj_dim).T    # (P, P)

        # References: kernel-matched bf16 casts (tight) and exact f32 (loose).
        out_c, attn_c = self_attention_ref(x, wq, wk, wv, wo,
                                           d_head=d_head, num_heads=num_heads,
                                           compute_dtype=jnp.bfloat16)
        out_f, attn_f = self_attention_ref(x, wq, wk, wv, wo,
                                           d_head=d_head, num_heads=num_heads,
                                           compute_dtype=jnp.float32)

        for bblk in (1, B):
            out, attn = self_attention_pallas(x, wq, wk, wv, wo,
                                              d_head=d_head,
                                              num_heads=num_heads,
                                              batch_block=bblk)
            jax.block_until_ready((out, attn))

            assert jnp.allclose(out, out_c, atol=5e-3, rtol=5e-3)
            assert jnp.allclose(attn, attn_c, atol=5e-3, rtol=5e-3)
            assert jnp.allclose(out, out_f, atol=3e-2, rtol=3e-2)
            assert jnp.allclose(attn, attn_f, atol=1e-2, rtol=1e-2)

    print("KERNEL_OK")
</pallas_src>

<mosaic_0001>
module attributes {stable_mosaic.version = 11 : i64} {
  func.func @_self_attention_kernel(%arg0: i32, %arg1: memref<1x8x32xbf16, #tpu.memory_space<vmem>>, %arg2: memref<32x192xbf16, #tpu.memory_space<vmem>>, %arg3: memref<64x64xbf16, #tpu.memory_space<vmem>>, %arg4: memref<1x8x64xf32, #tpu.memory_space<vmem>>, %arg5: memref<1x1x8x8xf32, #tpu.memory_space<vmem>>) attributes {dimension_semantics = [#tpu.dimension_semantics<parallel>], iteration_bounds = array<i64: 2>, scalar_prefetch = 0 : i64, scratch_operands = 0 : i64, tpu.core_type = #tpu.core_type<tc>, window_params = [{transform_indices = @transform_0, window_bounds = array<i64: 1, 8, 32>}, {pipeline_mode = #tpu.pipeline_mode<synchronous>, transform_indices = @transform_1, window_bounds = array<i64: 32, 192>}, {pipeline_mode = #tpu.pipeline_mode<synchronous>, transform_indices = @transform_2, window_bounds = array<i64: 64, 64>}, {transform_indices = @transform_3, window_bounds = array<i64: 1, 8, 64>}, {transform_indices = @transform_4, window_bounds = array<i64: 1, 1, 8, 8>}]} {
    %c0 = arith.constant 0 : index
    %c0_0 = arith.constant 0 : index
    %c0_1 = arith.constant 0 : index
    %0 = vector.load %arg1[%c0, %c0_0, %c0_1] : memref<1x8x32xbf16, #tpu.memory_space<vmem>>, vector<1x8x32xbf16>
    %1 = vector.shape_cast %0 : vector<1x8x32xbf16> to vector<8x32xbf16>
    %c0_2 = arith.constant 0 : index
    %c0_3 = arith.constant 0 : index
    %2 = vector.load %arg2[%c0_2, %c0_3] : memref<32x192xbf16, #tpu.memory_space<vmem>>, vector<32x192xbf16>
    %cst = arith.constant dense<0.000000e+00> : vector<8x192xf32>
    %3 = tpu.matmul %1, %2, %cst {dimension_numbers = #tpu.dot_dimension_numbers<[1], [0], [0], [1], [0, 0, 1, 1], [], []>} : vector<8x32xbf16>, vector<32x192xbf16>, vector<8x192xf32> -> vector<8x192xf32>
    %4 = arith.truncf %3 : vector<8x192xf32> to vector<8x192xbf16>
    %5 = vector.extract_strided_slice %4 {offsets = [0, 0], sizes = [8, 64], strides = [1, 1]} : vector<8x192xbf16> to vector<8x64xbf16>
    %6 = vector.extract_strided_slice %4 {offsets = [0, 64], sizes = [8, 64], strides = [1, 1]} : vector<8x192xbf16> to vector<8x64xbf16>
    %7 = vector.extract_strided_slice %4 {offsets = [0, 128], sizes = [8, 64], strides = [1, 1]} : vector<8x192xbf16> to vector<8x64xbf16>
    %cst_4 = arith.constant dense<0.000000e+00> : vector<8x8xf32>
    %8 = tpu.matmul %5, %6, %cst_4 {dimension_numbers = #tpu.dot_dimension_numbers<[1], [1], [0], [0], [0, 0, 1, 0], [], []>} : vector<8x64xbf16>, vector<8x64xbf16>, vector<8x8xf32> -> vector<8x8xf32>
    %cst_5 = arith.constant dense<0xFF800000> : vector<8xf32>
    %9 = vector.multi_reduction <maximumf>, %8, %cst_5 [1] : vector<8x8xf32> to vector<8xf32>
    %10 = vector.shape_cast %9 : vector<8xf32> to vector<8x1xf32>
    %11 = vector.broadcast %10 : vector<8x1xf32> to vector<8x8xf32>
    %12 = arith.subf %8, %11 : vector<8x8xf32>
    %13 = math.exp %12 : vector<8x8xf32>
    %cst_6 = arith.constant dense<0.000000e+00> : vector<8xf32>
    %14 = vector.multi_reduction <add>, %13, %cst_6 [1] : vector<8x8xf32> to vector<8xf32>
    %15 = vector.shape_cast %14 : vector<8xf32> to vector<8x1xf32>
    %16 = vector.broadcast %15 : vector<8x1xf32> to vector<8x8xf32>
    %17 = arith.divf %13, %16 : vector<8x8xf32>
    %c0_7 = arith.constant 0 : index
    %c0_8 = arith.constant 0 : index
    %c0_9 = arith.constant 0 : index
    %c0_10 = arith.constant 0 : index
    %18 = vector.load %arg5[%c0_7, %c0_8, %c0_9, %c0_10] : memref<1x1x8x8xf32, #tpu.memory_space<vmem>>, vector<1x1x8x8xf32>
    %19 = vector.shape_cast %18 : vector<1x1x8x8xf32> to vector<8x8xf32>
    %20 = vector.shape_cast %17 : vector<8x8xf32> to vector<1x1x8x8xf32>
    tpu.vector_store %arg5[%c0_7, %c0_8, %c0_9, %c0_10], %20 {strides = array<i32>} : memref<1x1x8x8xf32, #tpu.memory_space<vmem>>, vector<1x1x8x8xf32>,
    %21 = arith.truncf %17 : vector<8x8xf32> to vector<8x8xbf16>
    %cst_11 = arith.constant dense<0.000000e+00> : vector<8x64xf32>
    %22 = tpu.matmul %21, %7, %cst_11 {dimension_numbers = #tpu.dot_dimension_numbers<[1], [0], [0], [1], [0, 0, 1, 1], [], []>} : vector<8x8xbf16>, vector<8x64xbf16>, vector<8x64xf32> -> vector<8x64xf32>
    %23 = arith.truncf %22 : vector<8x64xf32> to vector<8x64xbf16>
    %c0_12 = arith.constant 0 : index
    %c0_13 = arith.constant 0 : index
    %24 = vector.load %arg3[%c0_12, %c0_13] : memref<64x64xbf16, #tpu.memory_space<vmem>>, vector<64x64xbf16>
    %cst_14 = arith.constant dense<0.000000e+00> : vector<8x64xf32>
    %25 = tpu.matmul %23, %24, %cst_14 {dimension_numbers = #tpu.dot_dimension_numbers<[1], [0], [0], [1], [0, 0, 1, 1], [], []>} : vector<8x64xbf16>, vector<64x64xbf16>, vector<8x64xf32> -> vector<8x64xf32>
    %c0_15 = arith.constant 0 : index
    %c0_16 = arith.constant 0 : index
    %c0_17 = arith.constant 0 : index
    %26 = vector.load %arg4[%c0_15, %c0_16, %c0_17] : memref<1x8x64xf32, #tpu.memory_space<vmem>>, vector<1x8x64xf32>
    %27 = vector.shape_cast %26 : vector<1x8x64xf32> to vector<8x64xf32>
    %28 = vector.shape_cast %25 : vector<8x64xf32> to vector<1x8x64xf32>
    tpu.vector_store %arg4[%c0_15, %c0_16, %c0_17], %28 {strides = array<i32>} : memref<1x8x64xf32, #tpu.memory_space<vmem>>, vector<1x8x64xf32>,
    return
  }
  func.func @transform_0(%arg0: i32) -> (i32, i32, i32) {
    %c0_i32 = arith.constant 0 : i32
    %c0_i32_0 = arith.constant 0 : i32
    %c0_i32_1 = arith.constant 0 : i32
    return %arg0, %c0_i32, %c0_i32_0 : i32, i32, i32
  }
  func.func @transform_1(%arg0: i32) -> (i32, i32) {
    %c0_i32 = arith.constant 0 : i32
    %c0_i32_0 = arith.constant 0 : i32
    %c0_i32_1 = arith.constant 0 : i32
    return %c0_i32, %c0_i32_0 : i32, i32
  }
  func.func @transform_2(%arg0: i32) -> (i32, i32) {
    %c0_i32 = arith.constant 0 : i32
    %c0_i32_0 = arith.constant 0 : i32
    %c0_i32_1 = arith.constant 0 : i32
    return %c0_i32, %c0_i32_0 : i32, i32
  }
  func.func @transform_3(%arg0: i32) -> (i32, i32, i32) {
    %c0_i32 = arith.constant 0 : i32
    %c0_i32_0 = arith.constant 0 : i32
    %c0_i32_1 = arith.constant 0 : i32
    return %arg0, %c0_i32, %c0_i32_0 : i32, i32, i32
  }
  func.func @transform_4(%arg0: i32) -> (i32, i32, i32, i32) {
    %c0_i32 = arith.constant 0 : i32
    %c0_i32_0 = arith.constant 0 : i32
    %c0_i32_1 = arith.constant 0 : i32
    %c0_i32_2 = arith.constant 0 : i32
    return %arg0, %c0_i32, %c0_i32_0, %c0_i32_1 : i32, i32, i32, i32
  }
}

</mosaic_0001>

<llo_original>
// kernel: tpu_custom_call.1
$region0: #{tpu_custom_call.1}
  #allocation0 [shape = 'u32[]', space=smem, size = 0x4, offset = 0x4, fixed_abs, tag = 'smem constant byte address 0x4 - core index']
  #allocation1 [shape = 'u32[144,128]{1,0:T(1,128)}', space=vmem, size = 0x12000, scoped, tag = 'internal scratch']
  %s0 = inlined_call_operand.hbm [shape: bf16[2,8,32], index: 0, kind: input, shape index: {}]
  %s1 = inlined_call_operand.hbm [shape: bf16[32,192], index: 1, kind: input, shape index: {}]
  %s2 = inlined_call_operand.hbm [shape: bf16[64,64], index: 2, kind: input, shape index: {}]
  %s3 = inlined_call_operand.hbm [shape: f32[2,8,64], index: 3, kind: output, shape index: {0}]
  %s4 = inlined_call_operand.hbm [shape: f32[2,1,8,8], index: 4, kind: output, shape index: {1}]
  %5 = xla_tuple %s3, %s4
  %s6 = sld [smem:[#allocation0]]
  $region65: #{tpu_custom_call.1} parent=0
    _
  %s8 = ssub.s32 1, %s6
  %s9 = scalar_select 0, %s8, %s6
  $region1: #{tpu_custom_call.1} parent=0
    #allocation2 [shape = 'u8[4096]{0}', space=vmem, size = 0x1000, scoped, tag = 'input window, operand 0']
    #allocation3 [shape = 's32[2]{0}', space=sflag, size = 0x8, scoped, tag = 'scoped memory for tpu_custom_call.1']
    #allocation4 [shape = 's32[2]{0}', space=sflag, size = 0x8, scoped, tag = 'scoped memory for tpu_custom_call.1']
    #allocation5 [shape = 'u8[16384]{0}', space=vmem, size = 0x4000, scoped, tag = 'input window, operand 1, single buffered']
    #allocation6 [shape = 's32[1]{0}', space=sflag, size = 0x4, scoped, tag = 'scoped memory for tpu_custom_call.1']
    #allocation7 [shape = 'u8[16384]{0}', space=vmem, size = 0x4000, scoped, tag = 'input window, operand 2, single buffered']
    #allocation8 [shape = 'u8[8192]{0}', space=vmem, size = 0x2000, scoped, tag = 'output window, operand 0']
    #allocation9 [shape = 'u8[8192]{0}', space=vmem, size = 0x2000, scoped, tag = 'output window, operand 1']
    #allocation10 [shape = 's32[2]{0}', space=sflag, size = 0x8, scoped, tag = 'scoped memory for tpu_custom_call.1']
    %10 = vsyncpa [#allocation3], 0
    %s11 = scalar_lea.sflag [#allocation3], 1
    %12 = vsyncpa %s11, 0
    %13 = vsyncpa [#allocation6], 0
    %14 = vsyncpa [#allocation4], 0
    %s15 = scalar_lea.sflag [#allocation4], 1
    %16 = vsyncpa %s15, 0
    %17 = vsyncpa [#allocation10], 0
    %s18 = scalar_lea.sflag [#allocation10], 1
    %19 = vsyncpa %s18, 0
    loop: start=0, step=1, limit=4
    $region2: #{tpu_custom_call.1} parent=1 // loop_pre_header
      _
    $region3: #{tpu_custom_call.1} parent=1 // loop_header
      %s21 = sphi 0, %s25
      %p22 = scmp.ge.s32.totalorder %s21, 4
      %s31 = sphi 0, %s33
      %s34 = sphi 0, %s31
      %s35 = sphi 0, %s34
      %s51 = sphi 0, %s35
      %s55 = sphi 0, %s55
      %s57 = sphi 0, %s55
      %s58 = sphi 0, %s57
      %s72 = sphi 0, %s58
      %s76 = sphi 0, %s76
      %s78 = sphi 0, %s76
      %s79 = sphi 0, %s78
      %s93 = sphi 0, %s79
      %s99 = sphi 0, %s101
      %s102 = sphi 0, %s99
      %s103 = sphi 0, %s102
      %s119 = sphi 0, %s103
      %s125 = sphi 0, %s127
      %s128 = sphi 0, %s125
      %s129 = sphi 0, %s128
      %s145 = sphi 0, %s129
    $region4: #{tpu_custom_call.1} parent=1 // loop_header_branch
      %24 = sbr.rel (%p22) target = $region8
    $region5: #{tpu_custom_call.1} parent=1 // loop_body
      %s26 = ssub.s32 %s21, 1
      %s27 = ssub.s32 %s21, 2
      %s28 = sadd.s32 %s21, 1
      %s29 = ssub.s32 %s21, %s28
      %p30 = scmp.eq.s32.totalorder %s29, 0
      %s32 = sadd.s32 %s31, 1
      %s33 = scalar_select %p30, %s31, %s32
      %p36 = pneg %p30
      %p37 = scmp.eq.s32.totalorder %s21, 1
      %p38 = por %p36, %p37
      %p39 = scmp.ne.s32.totalorder %s31, %s34
      %p40 = scmp.eq.s32.totalorder %s21, 0
      %p41 = por %p39, %p40
      %p42 = scmp.ne.s32.totalorder %s31, %s34
      %p43 = scmp.eq.s32.totalorder %s26, 1
      %p44 = por %p42, %p43
      %p45 = scmp.ne.s32.totalorder %s34, %s35
      %p46 = scmp.eq.s32.totalorder %s26, 0
      %p47 = por %p45, %p46
      %p48 = scmp.ne.s32.totalorder %s34, %s35
      %p49 = scmp.eq.s32.totalorder %s27, 1
      %p50 = por %p48, %p49
      %p52 = scmp.ne.s32.totalorder %s35, %s51
      %p53 = scmp.eq.s32.totalorder %s27, 0
      %p54 = por %p52, %p53
      %s56 = sadd.s32 %s55, 1
      %p59 = scmp.eq.s32.totalorder %s21, 1
      %p60 = scmp.ne.s32.totalorder %s55, %s57
      %p61 = scmp.eq.s32.totalorder %s21, 0
      %p62 = por %p60, %p61
      %p63 = scmp.ne.s32.totalorder %s55, %s57
      %p64 = scmp.eq.s32.totalorder %s26, 1
      %p65 = por %p63, %p64
      %p66 = scmp.ne.s32.totalorder %s57, %s58
      %p67 = scmp.eq.s32.totalorder %s26, 0
      %p68 = por %p66, %p67
      %p69 = scmp.ne.s32.totalorder %s57, %s58
      %p70 = scmp.eq.s32.totalorder %s27, 1
      %p71 = por %p69, %p70
      %p73 = scmp.ne.s32.totalorder %s58, %s72
      %p74 = scmp.eq.s32.totalorder %s27, 0
      %p75 = por %p73, %p74
      %s77 = sadd.s32 %s76, 1
      %p80 = scmp.eq.s32.totalorder %s21, 1
      %p81 = scmp.ne.s32.totalorder %s76, %s78
      %p82 = scmp.eq.s32.totalorder %s21, 0
      %p83 = por %p81, %p82
      %p84 = scmp.ne.s32.totalorder %s76, %s78
      %p85 = scmp.eq.s32.totalorder %s26, 1
      %p86 = por %p84, %p85
      %p87 = scmp.ne.s32.totalorder %s78, %s79
      %p88 = scmp.eq.s32.totalorder %s26, 0
      %p89 = por %p87, %p88
      %p90 = scmp.ne.s32.totalorder %s78, %s79
      %p91 = scmp.eq.s32.totalorder %s27, 1
      %p92 = por %p90, %p91
      %p94 = scmp.ne.s32.totalorder %s79, %s93
      %p95 = scmp.eq.s32.totalorder %s27, 0
      %p96 = por %p94, %p95
      %s97 = ssub.s32 %s21, %s28
      %p98 = scmp.eq.s32.totalorder %s97, 0
      %s100 = sadd.s32 %s99, 1
      %s101 = scalar_select %p98, %s99, %s100
      %p104 = pneg %p98
      %p105 = scmp.eq.s32.totalorder %s21, 1
      %p106 = por %p104, %p105
      %p107 = scmp.ne.s32.totalorder %s99, %s102
      %p108 = scmp.eq.s32.totalorder %s21, 0
      %p109 = por %p107, %p108
      %p110 = scmp.ne.s32.totalorder %s99, %s102
      %p111 = scmp.eq.s32.totalorder %s26, 1
      %p112 = por %p110, %p111
      %p113 = scmp.ne.s32.totalorder %s102, %s103
      %p114 = scmp.eq.s32.totalorder %s26, 0
      %p115 = por %p113, %p114
      %p116 = scmp.ne.s32.totalorder %s102, %s103
      %p117 = scmp.eq.s32.totalorder %s27, 1
      %p118 = por %p116, %p117
      %p120 = scmp.ne.s32.totalorder %s103, %s119
      %p121 = scmp.eq.s32.totalorder %s27, 0
      %p122 = por %p120, %p121
      %s123 = ssub.s32 %s21, %s28
      %p124 = scmp.eq.s32.totalorder %s123, 0
      %s126 = sadd.s32 %s125, 1
      %s127 = scalar_select %p124, %s125, %s126
      %p130 = pneg %p124
      %p131 = scmp.eq.s32.totalorder %s21, 1
      %p132 = por %p130, %p131
      %p133 = scmp.ne.s32.totalorder %s125, %s128
      %p134 = scmp.eq.s32.totalorder %s21, 0
      %p135 = por %p133, %p134
      %p136 = scmp.ne.s32.totalorder %s125, %s128
      %p137 = scmp.eq.s32.totalorder %s26, 1
      %p138 = por %p136, %p137
      %p139 = scmp.ne.s32.totalorder %s128, %s129
      %p140 = scmp.eq.s32.totalorder %s26, 0
      %p141 = por %p139, %p140
      %p142 = scmp.ne.s32.totalorder %s128, %s129
      %p143 = scmp.eq.s32.totalorder %s27, 1
      %p144 = por %p142, %p143
      %p146 = scmp.ne.s32.totalorder %s129, %s145
      %p147 = scmp.eq.s32.totalorder %s27, 0
      %p148 = por %p146, %p147
      %p149 = scmp.le.s32.totalorder 1, %s21
      %p150 = scmp.lt.s32.totalorder %s21, 3
      %p151 = pnand %p149, %p150
      %p152 = pneg %p151
      // Predicated region
      $region9: #{tpu_custom_call.1} parent=5 // pred_check
        _
      $region10: #{tpu_custom_call.1} parent=5 // pred_check_branch
        %154 = sbr.rel (%p151) target = $region12
      $region11: #{tpu_custom_call.1} parent=5 // pred_region
        %s155 = ssub.s32 %s21, 1
        // Predicated region
        $region13: #{tpu_custom_call.1} parent=11 // pred_check
          %p156 = pneg %p68
        $region14: #{tpu_custom_call.1} parent=11 // pred_check_branch
          %158 = sbr.rel (%p156) target = $region16
        $region15: #{tpu_custom_call.1} parent=11 // pred_region
          %s160 = ssub.s32 512, 512
          %161 = vsyncadd [#allocation6], %s160
          %s162 = sshll.u32 [#allocation5], 4
          %s163 = int_to_ptr.vmem [resolvable:$true] %s162
          %168 = dma.hbm_to_vmem [thread:$0]  %s1, 512, %s163, [#allocation6], 128, 128, 8
        $region16: #{tpu_custom_call.1} parent=11 // pred_fallthru
          _
        // Predicated region
        $region17: #{tpu_custom_call.1} parent=11 // pred_check
          %p169 = pneg %p89
        $region18: #{tpu_custom_call.1} parent=11 // pred_check_branch
          %171 = sbr.rel (%p169) target = $region20
        $region19: #{tpu_custom_call.1} parent=11 // pred_region
          %s173 = ssub.s32 512, 512
          %174 = vsyncadd [#allocation6], %s173
          %s175 = sshll.u32 [#allocation7], 4
          %s176 = int_to_ptr.vmem [resolvable:$true] %s175
          %181 = dma.hbm_to_vmem [thread:$0]  %s2, 512, %s176, [#allocation6], 64, 64, 4
        $region20: #{tpu_custom_call.1} parent=11 // pred_fallthru
          _
      $region12: #{tpu_custom_call.1} parent=5 // pred_fallthru
        _
      %p182 = scmp.lt.s32.totalorder %s21, 2
      // Predicated region
      $region21: #{tpu_custom_call.1} parent=5 // pred_check
        %p183 = pneg %p182
      $region22: #{tpu_custom_call.1} parent=5 // pred_check_branch
        %185 = sbr.rel (%p183) target = $region24
      $region23: #{tpu_custom_call.1} parent=5 // pred_region
        // Predicated region
        $region25: #{tpu_custom_call.1} parent=23 // pred_check
          %p186 = pneg %p41
        $region26: #{tpu_custom_call.1} parent=23 // pred_check_branch
          %188 = sbr.rel (%p186) target = $region28
        $region27: #{tpu_custom_call.1} parent=23 // pred_region
          %s189 = sand.u32 %s31, 1
          %s190 = scalar_lea.sflag [#allocation3], %s189
          %s191 = sand.u32 %s31, 1
          %s192 = smul.addr %s191, 4
          %s193 = scalar_lea.vmem [#allocation2], %s192
          %s195 = ssub.s32 64, 64
          %196 = vsyncadd %s190, %s195
          %s197 = smul.addr %s21, 64
          %s198 = scalar_lea.hbm %s0, %s197
          %s200 = sshll.u32 %s193, 4
          %s201 = int_to_ptr.vmem [resolvable:$true] %s200
          %203 = dma.hbm_to_vmem [thread:$0]  %s198, 64, %s201, %s190
        $region28: #{tpu_custom_call.1} parent=23 // pred_fallthru
          _
      $region24: #{tpu_custom_call.1} parent=5 // pred_fallthru
        _
      %p204 = scmp.le.s32.totalorder 1, %s21
      %p205 = scmp.lt.s32.totalorder %s21, 3
      %p206 = pnand %p204, %p205
      %p207 = pneg %p206
      // Predicated region
      $region29: #{tpu_custom_call.1} parent=5 // pred_check
        _
      $region30: #{tpu_custom_call.1} parent=5 // pred_check_branch
        %209 = sbr.rel (%p206) target = $region32
      $region31: #{tpu_custom_call.1} parent=5 // pred_region
        %s210 = ssub.s32 %s21, 1
        %s211 = sand.u32 %s34, 1
        %s212 = scalar_lea.sflag [#allocation3], %s211
        %s213 = sand.u32 %s34, 1
        %s214 = smul.addr %s213, 4
        %s215 = scalar_lea.vmem [#allocation2], %s214
        // Predicated region
        $region33: #{tpu_custom_call.1} parent=31 // pred_check
          %p216 = pneg %p47
        $region34: #{tpu_custom_call.1} parent=31 // pred_check_branch
          %218 = sbr.rel (%p216) target = $region36
        $region35: #{tpu_custom_call.1} parent=31 // pred_region
          %219 = dma.done %s212, 64
        $region36: #{tpu_custom_call.1} parent=31 // pred_fallthru
          _
        // Predicated region
        $region37: #{tpu_custom_call.1} parent=31 // pred_check
          %p220 = pneg %p68
        $region38: #{tpu_custom_call.1} parent=31 // pred_check_branch
          %222 = sbr.rel (%p220) target = $region40
        $region39: #{tpu_custom_call.1} parent=31 // pred_region
          %223 = dma.done [#allocation6], 512
        $region40: #{tpu_custom_call.1} parent=31 // pred_fallthru
          _
        // Predicated region
        $region41: #{tpu_custom_call.1} parent=31 // pred_check
          %p224 = pneg %p89
        $region42: #{tpu_custom_call.1} parent=31 // pred_check_branch
          %226 = sbr.rel (%p224) target = $region44
        $region43: #{tpu_custom_call.1} parent=31 // pred_region
          %227 = dma.done [#allocation6], 512
        $region44: #{tpu_custom_call.1} parent=31 // pred_fallthru
          _
        %s228 = sand.u32 %s34, 1
        %s229 = scalar_lea.sflag [#allocation3], %s228
        %s230 = sand.u32 %s34, 1
        %s231 = smul.addr %s230, 4
        %s232 = scalar_lea.vmem [#allocation2], %s231
        %p233 = pneg %p47
        %p234 = pneg %p44
        %p235 = pneg %p68
        %p236 = pneg %p65
        %p237 = pneg %p89
        %p238 = pneg %p86
        %p239 = pneg %p115
        %p240 = pneg %p112
        %s241 = sand.u32 %s102, 1
        %s242 = scalar_lea.sflag [#allocation4], %s241
        %s243 = sand.u32 %s102, 1
        %s244 = smul.addr %s243, 8
        %s245 = scalar_lea.vmem [#allocation8], %s244
        %p246 = pneg %p141
        %p247 = pneg %p138
        %s248 = sand.u32 %s128, 1
        %s249 = scalar_lea.sflag [#allocation10], %s248
        %s250 = sand.u32 %s128, 1
        %s251 = smul.addr %s250, 8
        %s252 = scalar_lea.vmem [#allocation9], %s251
        %v254 = vld [vmem:[%s215] sm:$0xf]
        %v255 = vld [vmem:[#allocation5] sm:$0xff]
        %v256 = vld [vmem:[#allocation5 + $0x8] sm:$0xff]
        %v257 = vld [vmem:[#allocation5 + $0x10] sm:$0xff]
        %v258 = vld [vmem:[#allocation5 + $0x18] sm:$0xff]
        %v263 = vunpack.c.l.b16 %v255
        %v264 = vunpack.c.h.b16 %v255
        %v265 = vunpack.c.l.b16 %v256
        %v266 = vunpack.c.h.b16 %v256
        %v267 = vunpack.c.l.b16 %v257
        %v268 = vunpack.c.h.b16 %v257
        %v269 = vunpack.c.l.b16 %v258
        %v270 = vunpack.c.h.b16 %v258
        %v271 = vpack.c.b16 %v265, %v263
        %v272 = vpack.c.b16 %v266, %v264
        %v273 = vpack.c.b16 %v269, %v267
        %v274 = vpack.c.b16 %v270, %v268
        %vm279 = vcmask 261120
        %v281 = vsel %vm279, %v254, 0
        %283 = vmatprep.subr.bf16.mxu0 %v272
        %284 = vmatpush1.bf16.msra.mxu0 %v271
        %285 = vmatprep.subr.bf16.mxu0 %v274
        %286 = vmatpush1.bf16.msra.mxu0 %v273
        %287 = vmatprep.subr.bf16.mxu0 0
        %288 = vmatpush1.bf16.msra.mxu0 0
        %289 = vmatprep.subr.bf16.mxu0 0
        %290 = vmatpush1.bf16.msra.mxu0 0
        %291 = vmatprep.subr.bf16.mxu0 0
        %292 = vmatpush1.bf16.msra.mxu0 0
        %293 = vmatprep.subr.bf16.mxu0 0
        %294 = vmatpush1.bf16.msra.mxu0 0
        %295 = vmatprep.subr.bf16.mxu0 0
        %296 = vmatpush1.bf16.msra.mxu0 0
        %297 = vmatprep.subr.bf16.mxu0 0
        %298 = vmatpush1.bf16.msra.mxu0 0
        %299 = vmatprep.subr.bf16.mxu0 0
        %300 = vmatpush1.bf16.msra.mxu0 0
        %301 = vmatprep.subr.bf16.mxu0 0
        %302 = vmatpush1.bf16.msra.mxu0 0
        %303 = vmatprep.subr.bf16.mxu0 0
        %304 = vmatpush1.bf16.msra.mxu0 0
        %305 = vmatprep.subr.bf16.mxu0 0
        %306 = vmatpush1.bf16.msra.mxu0 0
        %307 = vmatprep.subr.bf16.mxu0 0
        %308 = vmatpush1.bf16.msra.mxu0 0
        %309 = vmatprep.subr.bf16.mxu0 0
        %310 = vmatpush1.bf16.msra.mxu0 0
        %311 = vmatprep.subr.bf16.mxu0 0
        %312 = vmatpush1.bf16.msra.mxu0 0
        %313 = vmatprep.subr.bf16.mxu0 0
        %314 = vmatpush1.bf16.msra.mxu0 0
        %315 = vmatprep.mubr.bf16.mxu0 0
        %316 = vmatmul.mubr.bf16.gmra.mrb[0].mxu0 %v281
        %v317 = vpop.f32.mrb[0].mxu0
        %v318 = vadd.f32 0.0, %v317
        %v319 = vpop.f32.mrb[0].mxu0
        %v320 = vadd.f32 0.0, %v319
        %v321 = vpop.f32.mrb[0].mxu0
        %v322 = vpop.f32.mrb[0].mxu0
        %323 = vdwg.mxu0
        %v324 = vpack.c.bf16 %v318, %v318
        %v325 = vpack.c.bf16 %v320, %v320
        %327 = vrot.lane.b32.xlu0 %v324, 64
        %v328 = vpop.permute.xlu0 %327
        %vm329 = vcmask 523264
        %v331 = vsel %vm329, %v324, 0
        %v334 = vsel %vm329, %v328, 0
        %336 = vmatprep.subr.bf16.mxu0 0
        %337 = vmatpush1.bf16.xpose.msra.mxu0 %v334
        %338 = vmatprep.subr.bf16.mxu0 0
        %339 = vmatpush1.bf16.xpose.msra.mxu0 0
        %340 = vmatprep.subr.bf16.mxu0 0
        %341 = vmatpush1.bf16.xpose.msra.mxu0 0
        %342 = vmatprep.subr.bf16.mxu0 0
        %343 = vmatpush1.bf16.xpose.msra.mxu0 0
        %344 = vmatprep.subr.bf16.mxu0 0
        %345 = vmatpush1.bf16.xpose.msra.mxu0 0
        %346 = vmatprep.subr.bf16.mxu0 0
        %347 = vmatpush1.bf16.xpose.msra.mxu0 0
        %348 = vmatprep.subr.bf16.mxu0 0
        %349 = vmatpush1.bf16.xpose.msra.mxu0 0
        %350 = vmatprep.subr.bf16.mxu0 0
        %351 = vmatpush1.bf16.xpose.msra.mxu0 0
        %352 = vmatprep.subr.bf16.mxu0 0
        %353 = vmatpush1.bf16.xpose.msra.mxu0 0
        %354 = vmatprep.subr.bf16.mxu0 0
        %355 = vmatpush1.bf16.xpose.msra.mxu0 0
        %356 = vmatprep.subr.bf16.mxu0 0
        %357 = vmatpush1.bf16.xpose.msra.mxu0 0
        %358 = vmatprep.subr.bf16.mxu0 0
        %359 = vmatpush1.bf16.xpose.msra.mxu0 0
        %360 = vmatprep.subr.bf16.mxu0 0
        %361 = vmatpush1.bf16.xpose.msra.mxu0 0
        %362 = vmatprep.subr.bf16.mxu0 0
        %363 = vmatpush1.bf16.xpose.msra.mxu0 0
        %364 = vmatprep.subr.bf16.mxu0 0
        %365 = vmatpush1.bf16.xpose.msra.mxu0 0
        %366 = vmatprep.subr.bf16.mxu0 0
        %367 = vmatpush1.bf16.xpose.msra.mxu0 0
        %368 = vmatprep.mubr.bf16.mxu0 0
        %369 = vmatmul.mubr.bf16.gmra.mrb[0].mxu0 %v331
        %v370 = vpop.f32.mrb[0].mxu0
        %v371 = vadd.f32 0.0, %v370
        %v372 = vpop.f32.mrb[0].mxu0
        %v373 = vpop.f32.mrb[0].mxu0
        %v374 = vpop.f32.mrb[0].mxu0
        %375 = vdwg.mxu0
        %vm376 = vcmask 64512
        %v377 = vsel %vm376, %v371, -inf
        %378 = vmax.xlane.f32.xlu0 %v377
        %v379 = vpop.xlane.xlu0 %378
        %v380 = vsub.f32 %v371, %v379
        %v381 = vmul.f32 %v380, 1.442695
        %v382 = vpow.pop %v381
        %v383 = vsel %vm376, %v382, 0.0
        %384 = vadd.xlane.f32.xlu0 %v383
        %v385 = vpop.xlane.xlu0 %384
        %v386 = vrcp.pop %v385
        %v387 = vmul.f32 %v382, %v386
        %388 = vst.msk [vmem:[%s252] sm:$0xff] %vm376, %v387
        %v389 = vpack.c.bf16 %v387, %v387
        %v391 = vsel %vm376, %v389, 0
        %vm393 = vcmask 1043456
        %v395 = vsel %vm393, %v325, 0
        %397 = vmatprep.subr.bf16.mxu0 0
        %398 = vmatpush1.bf16.msra.mxu0 %v395
        %399 = vmatprep.subr.bf16.mxu0 0
        %400 = vmatpush1.bf16.msra.mxu0 0
        %401 = vmatprep.subr.bf16.mxu0 0
        %402 = vmatpush1.bf16.msra.mxu0 0
        %403 = vmatprep.subr.bf16.mxu0 0
        %404 = vmatpush1.bf16.msra.mxu0 0
        %405 = vmatprep.subr.bf16.mxu0 0
        %406 = vmatpush1.bf16.msra.mxu0 0
        %407 = vmatprep.subr.bf16.mxu0 0
        %408 = vmatpush1.bf16.msra.mxu0 0
        %409 = vmatprep.subr.bf16.mxu0 0
        %410 = vmatpush1.bf16.msra.mxu0 0
        %411 = vmatprep.subr.bf16.mxu0 0
        %412 = vmatpush1.bf16.msra.mxu0 0
        %413 = vmatprep.subr.bf16.mxu0 0
        %414 = vmatpush1.bf16.msra.mxu0 0
        %415 = vmatprep.subr.bf16.mxu0 0
        %416 = vmatpush1.bf16.msra.mxu0 0
        %417 = vmatprep.subr.bf16.mxu0 0
        %418 = vmatpush1.bf16.msra.mxu0 0
        %419 = vmatprep.subr.bf16.mxu0 0
        %420 = vmatpush1.bf16.msra.mxu0 0
        %421 = vmatprep.subr.bf16.mxu0 0
        %422 = vmatpush1.bf16.msra.mxu0 0
        %423 = vmatprep.subr.bf16.mxu0 0
        %424 = vmatpush1.bf16.msra.mxu0 0
        %425 = vmatprep.subr.bf16.mxu0 0
        %426 = vmatpush1.bf16.msra.mxu0 0
        %427 = vmatprep.subr.bf16.mxu0 0
        %428 = vmatpush1.bf16.msra.mxu0 0
        %429 = vmatprep.mubr.bf16.mxu0 0
        %430 = vmatmul.mubr.bf16.gmra.mrb[0].mxu0 %v391
        %v431 = vpop.f32.mrb[0].mxu0
        %v432 = vadd.f32 0.0, %v431
        %v433 = vpop.f32.mrb[0].mxu0
        %v434 = vpop.f32.mrb[0].mxu0
        %v435 = vpop.f32.mrb[0].mxu0
        %436 = vdwg.mxu0
        %v437 = vpack.c.bf16 %v432, %v432
        %v438 = vld [vmem:[#allocation7] sm:$0xf]
        %v439 = vld [vmem:[#allocation7 + $0x4] sm:$0xf]
        %v440 = vld [vmem:[#allocation7 + $0x8] sm:$0xf]
        %v441 = vld [vmem:[#allocation7 + $0xc] sm:$0xf]
        %v442 = vld [vmem:[#allocation7 + $0x10] sm:$0xf]
        %v443 = vld [vmem:[#allocation7 + $0x14] sm:$0xf]
        %v444 = vld [vmem:[#allocation7 + $0x18] sm:$0xf]
        %v445 = vld [vmem:[#allocation7 + $0x1c] sm:$0xf]
        %v454 = vunpack.c.l.b16 %v438
        %v455 = vunpack.c.l.b16 %v439
        %v456 = vunpack.c.l.b16 %v440
        %v457 = vunpack.c.l.b16 %v441
        %v458 = vunpack.c.l.b16 %v442
        %v459 = vunpack.c.l.b16 %v443
        %v460 = vunpack.c.l.b16 %v444
        %v461 = vunpack.c.l.b16 %v445
        %v462 = vpack.c.b16 %v455, %v454
        %v463 = vpack.c.b16 %v457, %v456
        %v464 = vpack.c.b16 %v459, %v458
        %v465 = vpack.c.b16 %v461, %v460
        %v471 = vsel %vm329, %v437, 0
        %473 = vmatprep.subr.bf16.mxu0 0
        %474 = vmatpush1.bf16.msra.mxu0 %v462
        %475 = vmatprep.subr.bf16.mxu0 0
        %476 = vmatpush1.bf16.msra.mxu0 %v463
        %477 = vmatprep.subr.bf16.mxu0 0
        %478 = vmatpush1.bf16.msra.mxu0 %v464
        %479 = vmatprep.subr.bf16.mxu0 0
        %480 = vmatpush1.bf16.msra.mxu0 %v465
        %481 = vmatprep.subr.bf16.mxu0 0
        %482 = vmatpush1.bf16.msra.mxu0 0
        %483 = vmatprep.subr.bf16.mxu0 0
        %484 = vmatpush1.bf16.msra.mxu0 0
        %485 = vmatprep.subr.bf16.mxu0 0
        %486 = vmatpush1.bf16.msra.mxu0 0
        %487 = vmatprep.subr.bf16.mxu0 0
        %488 = vmatpush1.bf16.msra.mxu0 0
        %489 = vmatprep.subr.bf16.mxu0 0
        %490 = vmatpush1.bf16.msra.mxu0 0
        %491 = vmatprep.subr.bf16.mxu0 0
        %492 = vmatpush1.bf16.msra.mxu0 0
        %493 = vmatprep.subr.bf16.mxu0 0
        %494 = vmatpush1.bf16.msra.mxu0 0
        %495 = vmatprep.subr.bf16.mxu0 0
        %496 = vmatpush1.bf16.msra.mxu0 0
        %497 = vmatprep.subr.bf16.mxu0 0
        %498 = vmatpush1.bf16.msra.mxu0 0
        %499 = vmatprep.subr.bf16.mxu0 0
        %500 = vmatpush1.bf16.msra.mxu0 0
        %501 = vmatprep.subr.bf16.mxu0 0
        %502 = vmatpush1.bf16.msra.mxu0 0
        %503 = vmatprep.subr.bf16.mxu0 0
        %504 = vmatpush1.bf16.msra.mxu0 0
        %505 = vmatprep.mubr.bf16.mxu0 0
        %506 = vmatmul.mubr.bf16.gmra.mrb[0].mxu0 %v471
        %v507 = vpop.f32.mrb[0].mxu0
        %v508 = vadd.f32 0.0, %v507
        %v509 = vpop.f32.mrb[0].mxu0
        %v510 = vpop.f32.mrb[0].mxu0
        %v511 = vpop.f32.mrb[0].mxu0
        %512 = vdwg.mxu0
        %513 = vst.msk [vmem:[%s245] sm:$0xff] %vm329, %v508
        %s514 = sand.u32 %s102, 1
        %s515 = scalar_lea.sflag [#allocation4], %s514
        %s516 = sand.u32 %s102, 1
        %s517 = smul.addr %s516, 8
        %s518 = scalar_lea.vmem [#allocation8], %s517
        %s519 = sand.u32 %s128, 1
        %s520 = scalar_lea.sflag [#allocation10], %s519
        %s521 = sand.u32 %s128, 1
        %s522 = smul.addr %s521, 8
        %s523 = scalar_lea.vmem [#allocation9], %s522
        // Predicated region
        $region45: #{tpu_custom_call.1} parent=31 // pred_check
          %p524 = pneg %p112
        $region46: #{tpu_custom_call.1} parent=31 // pred_check_branch
          %526 = sbr.rel (%p524) target = $region48
        $region47: #{tpu_custom_call.1} parent=31 // pred_region
          %s528 = ssub.s32 128, 128
          %529 = vsyncadd %s515, %s528
          %s530 = smul.addr %s26, 128
          %s531 = scalar_lea.hbm %s3, %s530
          %s533 = sshll.u32 %s518, 4
          %s534 = int_to_ptr.vmem [resolvable:$true] %s533
          %536 = dma.vmem_to_hbm [thread:$0]  %s534, 128, %s531, %s515
        $region48: #{tpu_custom_call.1} parent=31 // pred_fallthru
          _
        // Predicated region
        $region49: #{tpu_custom_call.1} parent=31 // pred_check
          %p537 = pneg %p138
        $region50: #{tpu_custom_call.1} parent=31 // pred_check_branch
          %539 = sbr.rel (%p537) target = $region52
        $region51: #{tpu_custom_call.1} parent=31 // pred_region
          %s541 = ssub.s32 128, 128
          %542 = vsyncadd %s520, %s541
          %s543 = smul.addr %s26, 128
          %s544 = scalar_lea.hbm %s4, %s543
          %s546 = sshll.u32 %s523, 4
          %s547 = int_to_ptr.vmem [resolvable:$true] %s546
          %549 = dma.vmem_to_hbm [thread:$0]  %s547, 128, %s544, %s520
        $region52: #{tpu_custom_call.1} parent=31 // pred_fallthru
          _
      $region32: #{tpu_custom_call.1} parent=5 // pred_fallthru
        _
      %p550 = scmp.le.s32.totalorder 2, %s21
      // Predicated region
      $region53: #{tpu_custom_call.1} parent=5 // pred_check
        %p551 = pneg %p550
      $region54: #{tpu_custom_call.1} parent=5 // pred_check_branch
        %553 = sbr.rel (%p551) target = $region56
      $region55: #{tpu_custom_call.1} parent=5 // pred_region
        %s554 = ssub.s32 %s21, 2
        // Predicated region
        $region57: #{tpu_custom_call.1} parent=55 // pred_check
          %p555 = pneg %p118
        $region58: #{tpu_custom_call.1} parent=55 // pred_check_branch
          %557 = sbr.rel (%p555) target = $region60
        $region59: #{tpu_custom_call.1} parent=55 // pred_region
          %s558 = sand.u32 %s103, 1
          %s559 = scalar_lea.sflag [#allocation4], %s558
          %s560 = sand.u32 %s103, 1
          %s561 = smul.addr %s560, 8
          %s562 = scalar_lea.vmem [#allocation8], %s561
          %563 = dma.done %s559, 128
        $region60: #{tpu_custom_call.1} parent=55 // pred_fallthru
          _
        // Predicated region
        $region61: #{tpu_custom_call.1} parent=55 // pred_check
          %p564 = pneg %p144
        $region62: #{tpu_custom_call.1} parent=55 // pred_check_branch
          %566 = sbr.rel (%p564) target = $region64
        $region63: #{tpu_custom_call.1} parent=55 // pred_region
          %s567 = sand.u32 %s129, 1
          %s568 = scalar_lea.sflag [#allocation10], %s567
          %s569 = sand.u32 %s129, 1
          %s570 = smul.addr %s569, 8
          %s571 = scalar_lea.vmem [#allocation9], %s570
          %572 = dma.done %s568, 128
        $region64: #{tpu_custom_call.1} parent=55 // pred_fallthru
          _
      $region56: #{tpu_custom_call.1} parent=5 // pred_fallthru
        _
    $region6: #{tpu_custom_call.1} parent=1 // loop_footer
      %s25 = sadd.s32 1, %s21
    $region7: #{tpu_custom_call.1} parent=1 // loop_footer_branch
      %20 = sbr.rel target = $region3
    $region8: #{tpu_custom_call.1} parent=1 // loop_exit
      _
    %573 = vsyncpa [#allocation3], 1
    %s574 = scalar_lea.sflag [#allocation3], 1
    %575 = vsyncpa %s574, 1
    %576 = vsyncpa [#allocation6], 1
    %577 = vsyncpa [#allocation4], 1
    %s578 = scalar_lea.sflag [#allocation4], 1
    %579 = vsyncpa %s578, 1
    %580 = vsyncpa [#allocation10], 1
    %s581 = scalar_lea.sflag [#allocation10], 1
    %582 = vsyncpa %s581, 1

</llo_original>
